<compile_context>
chip_gen: v7x
topology: tpu7x:2x2x1
jax: 0.10.0
libtpu: 0.0.40
codegen_flags: <defaults>
</compile_context>

<pallas_src>
import functools
import math

import jax
import jax.numpy as jnp
from jax import lax
from jax.experimental import pallas as pl
from jax.experimental.pallas import tpu as pltpu


_VMEM_BUDGET = 24 * 2**20   # per-step pipeline footprint target (fits v7x 64 MiB)


def _round_up(x, m):
    return (x + m - 1) // m * m


def _patch_embed_kernel(x_ref, w_ref, p_ref, o_ref, *, eps, inv_e):
    # x_ref: (TM, K)  bf16 im2col rows (last grid block may hold garbage rows
    #                 past M; they only pollute their own masked-out outputs)
    # w_ref: (K,  E)  bf16 flattened conv weight, K-order (i, j, c)  [resident]
    # p_ref: (3,  E)  f32  packed params: row0=conv bias, row1=ln gamma, row2=ln beta
    # o_ref: (TM, E)  lane output (exact E; sub-128 E uses masked stores, which
    #                 is cheaper than padded bytes on an HBM-bound kernel)
    p = p_ref[...]
    # bf16 x bf16 matmul on the MXU with f32 accumulation.
    y = jnp.dot(x_ref[...], w_ref[...], preferred_element_type=jnp.float32)
    y = y + p[0:1, :]                                   # conv bias

    # Two-pass (centered) LayerNorm statistics over the true E columns.
    mean = jnp.sum(y, axis=-1, keepdims=True) * inv_e
    yc = y - mean
    var = jnp.sum(yc * yc, axis=-1, keepdims=True) * inv_e
    inv = lax.rsqrt(var + eps)

    o_ref[...] = (yc * inv * p[1:2, :] + p[2:3, :]).astype(o_ref.dtype)


def _im2col_nhwc(x_nchw, kh, kw, sh, sw, ph, pw):
    """Overlapping patch extraction.  Transposes the *raw* input to NHWC once,
    then writes the patch matrix directly in (i, j, c) K-order — no transpose
    of the inflated patch tensor.  Returns ((B*Ho*Wo, kh*kw*C), Ho, Wo)."""
    B, C, H, W = x_nchw.shape
    Ho = (H + 2 * ph - kh) // sh + 1
    Wo = (W + 2 * pw - kw) // sw + 1
    x = jnp.transpose(x_nchw, (0, 2, 3, 1))                       # NHWC
    xp = jnp.pad(x, ((0, 0), (ph, ph), (pw, pw), (0, 0)))
    slabs = []
    for i in range(kh):
        for j in range(kw):
            slabs.append(
                xp[:, i:i + sh * (Ho - 1) + 1:sh,
                      j:j + sw * (Wo - 1) + 1:sw, :])             # (B, Ho, Wo, C)
    cols = jnp.stack(slabs, axis=3)                               # (B, Ho, Wo, kh*kw, C)
    cols = cols.reshape(B * Ho * Wo, kh * kw * C)                 # K-order (i, j, c)
    return cols, Ho, Wo


def _vmem_bytes(block_m, K, E, out_itemsize):
    cols = 2 * block_m * K * 2          # double-buffered bf16 cols tile
    wgt = 2 * K * E * 2                 # resident weight (worst case 2 buffers)
    prm = 2 * 3 * E * 4
    outb = 2 * block_m * E * out_itemsize
    tmp = 2 * block_m * E * 4           # f32 matmul result / centered temporaries
    return cols + wgt + prm + outb + tmp


def _pick_block_m(M, tile_m):
    tile_m = max(8, (int(tile_m) // 8) * 8)
    if M <= tile_m:
        if M >= 1024:
            # Split into ~2 balanced tiles so v7x's two TensorCores both work.
            return _round_up(-(-M // 2), 256)
        return M                         # full-dim block: always layout-legal
    return tile_m


def overlap_patch_embed(x, conv_w, conv_b, ln_g, ln_b, *, stride, eps=1e-5,
                        tile_m=512, out_dtype=None):
    """x: (B, C, H, W) NCHW (PyTorch convention).
    conv_w: (E, C, kh, kw), conv_b: (E,), ln_g/ln_b: (E,).
    Returns (out (B, Ho*Wo, E), Ho, Wo)."""
    B, C, H, W = x.shape
    E, Cw, kh, kw = conv_w.shape
    assert Cw == C
    ph, pw = kh // 2, kw // 2
    out_dtype = x.dtype if out_dtype is None else out_dtype
    out_isize = jnp.dtype(out_dtype).itemsize

    # Patch extraction in bf16 (pure data movement; casting first halves HBM
    # traffic for both the im2col source and result).
    # TODO(synk): fuse patch extraction into the kernel (implicit GEMM via a
    # phase-decomposed input layout + manual DMA); for small-C first stages the
    # in-VMEM patch formation costs more relayout work than the HBM bytes it
    # saves, so the im2col stays in the wrapper for now.
    cols, Ho, Wo = _im2col_nhwc(x.astype(jnp.bfloat16), kh, kw, stride, stride,
                                ph, pw)
    M, K = cols.shape

    # Weight flattened to (K, E) in matching (i, j, c) K-order; params packed.
    w_mat = conv_w.astype(jnp.bfloat16).transpose(2, 3, 1, 0).reshape(K, E)
    params = jnp.stack([conv_b, ln_g, ln_b]).astype(jnp.float32)   # (3, E)

    # Tile selection: large M tiles for roofline, shrunk to the VMEM budget
    # (v7x has 64 MiB physical VMEM / 32 MiB default scoped; v5e default scoped
    # is only 16 MiB, hence the explicit vmem_limit_bytes below).
    block_m = _pick_block_m(M, tile_m)
    while block_m > 256 and _vmem_bytes(block_m, K, E, out_isize) > _VMEM_BUDGET:
        block_m = max(256, ((block_m - 256) // 8) * 8)
    grid_m = pl.cdiv(M, block_m)
    vmem_limit = int(min(max(2 * _vmem_bytes(block_m, K, E, out_isize),
                             32 * 2**20), 64 * 2**20))

    kernel = functools.partial(_patch_embed_kernel, eps=float(eps),
                               inv_e=1.0 / float(E))
    cost = pl.CostEstimate(
        flops=2 * M * K * E,
        transcendentals=0,
        bytes_accessed=M * K * 2 + K * E * 2 + 3 * E * 4 + M * E * out_isize)

    # NOTE: the weight / params specs have constant index maps, so they stay
    # resident in VMEM across grid steps (pipeline_mode=pl.Buffered(1) could
    # reclaim their second buffer on the largest stages if VMEM gets tight).
    out = pl.pallas_call(
        kernel,
        out_shape=jax.ShapeDtypeStruct((M, E), out_dtype),
        grid_spec=pltpu.PrefetchScalarGridSpec(
            num_scalar_prefetch=0,
            grid=(grid_m,),
            in_specs=[
                pl.BlockSpec((block_m, K), lambda i: (i, 0)),   # streamed cols
                pl.BlockSpec((K, E), lambda i: (0, 0)),         # resident weight
                pl.BlockSpec((3, E), lambda i: (0, 0)),         # resident params
            ],
            out_specs=pl.BlockSpec((block_m, E), lambda i: (i, 0)),
        ),
        compiler_params=pltpu.CompilerParams(
            dimension_semantics=("parallel",),
            vmem_limit_bytes=vmem_limit),
        cost_estimate=cost,
    )(cols, w_mat, params)

    # Exact-shape output: only a free reshape remains (no slice copy).
    return out.reshape(B, Ho * Wo, E), Ho, Wo


def _reference(x, conv_w, conv_b, ln_g, ln_b, *, stride, eps=1e-5,
               matmul_dtype=jnp.float32):
    """Pure-JAX reference mirroring the PyTorch forward.  `matmul_dtype` lets
    us build a bf16-conv reference matching the kernel's matmul precision
    (accumulation stays f32 either way)."""
    kh, kw = conv_w.shape[2], conv_w.shape[3]
    y = lax.conv_general_dilated(
        x.astype(matmul_dtype), conv_w.astype(matmul_dtype),
        window_strides=(stride, stride),
        padding=((kh // 2, kh // 2), (kw // 2, kw // 2)),
        dimension_numbers=("NCHW", "OIHW", "NCHW"),
        preferred_element_type=jnp.float32)
    y = y + conv_b[None, :, None, None]
    B, E, Ho, Wo = y.shape
    y = y.reshape(B, E, Ho * Wo).transpose(0, 2, 1)    # (B, N, E)
    mean = jnp.mean(y, axis=-1, keepdims=True)
    var = jnp.mean((y - mean) ** 2, axis=-1, keepdims=True)
    y = (y - mean) * lax.rsqrt(var + eps) * ln_g + ln_b
    return y, Ho, Wo


def _make_params(key, C, patch, E):
    # Deterministic init mirroring _init_weights:
    #   Conv2d weight ~ N(0, sqrt(2 / fan_out)), fan_out = kh*kw*E; bias = 0.
    #   LayerNorm: weight = 1, bias = 0.
    fan_out = patch * patch * E
    conv_w = jax.random.normal(key, (E, C, patch, patch), dtype=jnp.float32) \
        * math.sqrt(2.0 / fan_out)
    conv_b = jnp.zeros((E,), dtype=jnp.float32)
    ln_g = jnp.ones((E,), dtype=jnp.float32)
    ln_b = jnp.zeros((E,), dtype=jnp.float32)
    return conv_w, conv_b, ln_g, ln_b


def _check_case(x, conv_w, conv_b, ln_g, ln_b, *, stride, eps, tile_m):
    out, Ho, Wo = overlap_patch_embed(
        x, conv_w, conv_b, ln_g, ln_b, stride=stride, eps=eps, tile_m=tile_m)
    out = jax.block_until_ready(out)

    # Tight check vs a reference using the same bf16 matmul inputs (f32 acc).
    ref_bf16, Ho_r, Wo_r = _reference(
        x, conv_w, conv_b, ln_g, ln_b, stride=stride, eps=eps,
        matmul_dtype=jnp.bfloat16)
    assert (Ho, Wo) == (Ho_r, Wo_r)
    assert out.shape == ref_bf16.shape
    assert jnp.allclose(out, ref_bf16, rtol=2e-3, atol=2e-3), \
        float(jnp.max(jnp.abs(out - ref_bf16)))

    # Loose sanity check vs the full-f32 reference (bounds bf16 drift).
    ref_f32, _, _ = _reference(
        x, conv_w, conv_b, ln_g, ln_b, stride=stride, eps=eps,
        matmul_dtype=jnp.float32)
    assert jnp.allclose(out, ref_f32, rtol=5e-2, atol=5e-2), \
        float(jnp.max(jnp.abs(out - ref_f32)))


if __name__ == "__main__":
    # Small shapes consistent with the module: patch=7, stride=4, in_chans=4,
    # embed_dim=32, batch=2.
    B, C, patch, stride, E = 2, 4, 7, 4, 32
    eps = 1e-5

    key = jax.random.PRNGKey(0)
    kx1, kx2, kw1, kw2 = jax.random.split(key, 4)
    conv_w, conv_b, ln_g, ln_b = _make_params(kw1, C, patch, E)

    # Case 1: 16x16 image -> single full-M block (M == 32, grid of 1).
    x1 = jax.random.normal(kx1, (B, C, 16, 16), dtype=jnp.float32)
    _check_case(x1, conv_w, conv_b, ln_g, ln_b, stride=stride, eps=eps,
                tile_m=512)

    # Case 2: 20x20 image with a tiny tile_m -> multi-step grid with a ragged
    # last M block (exercises resident weight + masked edge writes).
    x2 = jax.random.normal(kx2, (B, C, 20, 20), dtype=jnp.float32)
    _check_case(x2, conv_w, conv_b, ln_g, ln_b, stride=stride, eps=eps,
                tile_m=16)

    print("KERNEL_OK")
</pallas_src>

<mosaic_0001>
module attributes {stable_mosaic.version = 11 : i64} {
  func.func @_patch_embed_kernel(%arg0: i32, %arg1: memref<32x196xbf16, #tpu.memory_space<vmem>>, %arg2: memref<196x32xbf16, #tpu.memory_space<vmem>>, %arg3: memref<3x32xf32, #tpu.memory_space<vmem>>, %arg4: memref<32x32xf32, #tpu.memory_space<vmem>>) attributes {dimension_semantics = [#tpu.dimension_semantics<parallel>], iteration_bounds = array<i64: 1>, scalar_prefetch = 0 : i64, scratch_operands = 0 : i64, tpu.core_type = #tpu.core_type<tc>, window_params = [{transform_indices = @transform_0, window_bounds = array<i64: 32, 196>}, {pipeline_mode = #tpu.pipeline_mode<synchronous>, transform_indices = @transform_1, window_bounds = array<i64: 196, 32>}, {pipeline_mode = #tpu.pipeline_mode<synchronous>, transform_indices = @transform_2, window_bounds = array<i64: 3, 32>}, {transform_indices = @transform_3, window_bounds = array<i64: 32, 32>}]} {
    %c0 = arith.constant 0 : index
    %c0_0 = arith.constant 0 : index
    %0 = vector.load %arg3[%c0, %c0_0] : memref<3x32xf32, #tpu.memory_space<vmem>>, vector<3x32xf32>
    %c0_1 = arith.constant 0 : index
    %c0_2 = arith.constant 0 : index
    %1 = vector.load %arg1[%c0_1, %c0_2] : memref<32x196xbf16, #tpu.memory_space<vmem>>, vector<32x196xbf16>
    %c0_3 = arith.constant 0 : index
    %c0_4 = arith.constant 0 : index
    %2 = vector.load %arg2[%c0_3, %c0_4] : memref<196x32xbf16, #tpu.memory_space<vmem>>, vector<196x32xbf16>
    %cst = arith.constant dense<0.000000e+00> : vector<32x32xf32>
    %3 = tpu.matmul %1, %2, %cst {dimension_numbers = #tpu.dot_dimension_numbers<[1], [0], [0], [1], [0, 0, 1, 1], [], []>} : vector<32x196xbf16>, vector<196x32xbf16>, vector<32x32xf32> -> vector<32x32xf32>
    %4 = vector.extract_strided_slice %0 {offsets = [0, 0], sizes = [1, 32], strides = [1, 1]} : vector<3x32xf32> to vector<1x32xf32>
    %5 = vector.broadcast %4 : vector<1x32xf32> to vector<32x32xf32>
    %6 = arith.addf %3, %5 : vector<32x32xf32>
    %cst_5 = arith.constant dense<0.000000e+00> : vector<32xf32>
    %7 = vector.multi_reduction <add>, %6, %cst_5 [1] : vector<32x32xf32> to vector<32xf32>
    %8 = vector.shape_cast %7 : vector<32xf32> to vector<32x1xf32>
    %cst_6 = arith.constant 3.125000e-02 : f32
    %9 = vector.broadcast %cst_6 : f32 to vector<32x1xf32>
    %10 = arith.mulf %8, %9 : vector<32x1xf32>
    %11 = vector.broadcast %10 : vector<32x1xf32> to vector<32x32xf32>
    %12 = arith.subf %6, %11 : vector<32x32xf32>
    %13 = arith.mulf %12, %12 : vector<32x32xf32>
    %cst_7 = arith.constant dense<0.000000e+00> : vector<32xf32>
    %14 = vector.multi_reduction <add>, %13, %cst_7 [1] : vector<32x32xf32> to vector<32xf32>
    %15 = vector.shape_cast %14 : vector<32xf32> to vector<32x1xf32>
    %cst_8 = arith.constant 3.125000e-02 : f32
    %16 = vector.broadcast %cst_8 : f32 to vector<32x1xf32>
    %17 = arith.mulf %15, %16 : vector<32x1xf32>
    %cst_9 = arith.constant 9.99999974E-6 : f32
    %18 = vector.broadcast %cst_9 : f32 to vector<32x1xf32>
    %19 = arith.addf %17, %18 : vector<32x1xf32>
    %20 = math.rsqrt %19 : vector<32x1xf32>
    %21 = vector.broadcast %20 : vector<32x1xf32> to vector<32x32xf32>
    %22 = arith.mulf %12, %21 : vector<32x32xf32>
    %23 = vector.extract_strided_slice %0 {offsets = [1, 0], sizes = [1, 32], strides = [1, 1]} : vector<3x32xf32> to vector<1x32xf32>
    %24 = vector.broadcast %23 : vector<1x32xf32> to vector<32x32xf32>
    %25 = arith.mulf %22, %24 : vector<32x32xf32>
    %26 = vector.extract_strided_slice %0 {offsets = [2, 0], sizes = [1, 32], strides = [1, 1]} : vector<3x32xf32> to vector<1x32xf32>
    %27 = vector.broadcast %26 : vector<1x32xf32> to vector<32x32xf32>
    %28 = arith.addf %25, %27 : vector<32x32xf32>
    %c0_10 = arith.constant 0 : index
    %c0_11 = arith.constant 0 : index
    %29 = vector.load %arg4[%c0_10, %c0_11] : memref<32x32xf32, #tpu.memory_space<vmem>>, vector<32x32xf32>
    tpu.vector_store %arg4[%c0_10, %c0_11], %28 {strides = array<i32>} : memref<32x32xf32, #tpu.memory_space<vmem>>, vector<32x32xf32>,
    return
  }
  func.func @transform_0(%arg0: i32) -> (i32, i32) {
    %c0_i32 = arith.constant 0 : i32
    %c0_i32_0 = arith.constant 0 : i32
    return %arg0, %c0_i32 : i32, i32
  }
  func.func @transform_1(%arg0: i32) -> (i32, i32) {
    %c0_i32 = arith.constant 0 : i32
    %c0_i32_0 = arith.constant 0 : i32
    %c0_i32_1 = arith.constant 0 : i32
    return %c0_i32, %c0_i32_0 : i32, i32
  }
  func.func @transform_2(%arg0: i32) -> (i32, i32) {
    %c0_i32 = arith.constant 0 : i32
    %c0_i32_0 = arith.constant 0 : i32
    %c0_i32_1 = arith.constant 0 : i32
    return %c0_i32, %c0_i32_0 : i32, i32
  }
  func.func @transform_3(%arg0: i32) -> (i32, i32) {
    %c0_i32 = arith.constant 0 : i32
    %c0_i32_0 = arith.constant 0 : i32
    return %arg0, %c0_i32 : i32, i32
  }
}

</mosaic_0001>

<llo_original>
// kernel: tpu_custom_call.1
$region0: #{tpu_custom_call.1}
  #allocation0 [shape = 'u32[]', space=smem, size = 0x4, offset = 0x4, fixed_abs, tag = 'smem constant byte address 0x4 - core index']
  #allocation1 [shape = 'u32[144,128]{1,0:T(1,128)}', space=vmem, size = 0x12000, scoped, tag = 'internal scratch']
  %s0 = inlined_call_operand.vmem [shape: bf16[32,196], index: 0, kind: input, shape index: {}]
  %s1 = inlined_call_operand.vmem [shape: bf16[196,32], index: 1, kind: input, shape index: {}]
  %s2 = inlined_call_operand.vmem [shape: f32[3,32], index: 2, kind: input, shape index: {}]
  %s3 = inlined_call_operand.hbm [shape: f32[32,32], index: 3, kind: output, shape index: {}]
  %s4 = sld [smem:[#allocation0]]
  $region22: #{tpu_custom_call.1} parent=0
    _
  %s6 = ssub.s32 1, %s4
  %s7 = scalar_select 0, %s6, %s4
  $region1: #{tpu_custom_call.1} parent=0
    #allocation2 [shape = 'u8[16384]{0}', space=vmem, size = 0x4000, scoped, tag = 'output window, operand 0, single buffered']
    #allocation3 [shape = 's32[1]{0}', space=sflag, size = 0x4, scoped, tag = 'scoped memory for tpu_custom_call.1']
    %8 = vsyncpa [#allocation3], 0
    // Predicated region
    $region2: #{tpu_custom_call.1} parent=1 // pred_check
      _
    $region3: #{tpu_custom_call.1} parent=1 // pred_check_branch
      %10 = sbr.rel (0) target = $region5
    $region4: #{tpu_custom_call.1} parent=1 // pred_region
      _
    $region5: #{tpu_custom_call.1} parent=1 // pred_fallthru
      _
    // Predicated region
    $region6: #{tpu_custom_call.1} parent=1 // pred_check
      _
    $region7: #{tpu_custom_call.1} parent=1 // pred_check_branch
      %12 = sbr.rel (0) target = $region9
    $region8: #{tpu_custom_call.1} parent=1 // pred_region
      _
    $region9: #{tpu_custom_call.1} parent=1 // pred_fallthru
      _
    // Predicated region
    $region10: #{tpu_custom_call.1} parent=1 // pred_check
      _
    $region11: #{tpu_custom_call.1} parent=1 // pred_check_branch
      %14 = sbr.rel (0) target = $region13
    $region12: #{tpu_custom_call.1} parent=1 // pred_region
      _
    $region13: #{tpu_custom_call.1} parent=1 // pred_fallthru
      _
    %v16 = vld [vmem:[%s2] sm:$0x7]
    %v17 = vld [vmem:[%s0] sm:$0xff]
    %v18 = vld [vmem:[%s0 + $0x8] sm:$0xff]
    %v19 = vld [vmem:[%s0 + $0x10] sm:$0xff]
    %v20 = vld [vmem:[%s0 + $0x18] sm:$0xff]
    %v21 = vld [vmem:[%s1] sm:$0xf]
    %v22 = vld [vmem:[%s1 + $0x4] sm:$0xf]
    %v23 = vld [vmem:[%s1 + $0x8] sm:$0xf]
    %v24 = vld [vmem:[%s1 + $0xc] sm:$0xf]
    %v25 = vld [vmem:[%s1 + $0x10] sm:$0xf]
    %v26 = vld [vmem:[%s1 + $0x14] sm:$0xf]
    %v27 = vld [vmem:[%s1 + $0x18] sm:$0xf]
    %v28 = vld [vmem:[%s1 + $0x1c] sm:$0xf]
    %v29 = vld [vmem:[%s1 + $0x20] sm:$0xf]
    %v30 = vld [vmem:[%s1 + $0x24] sm:$0xf]
    %v31 = vld [vmem:[%s1 + $0x28] sm:$0xf]
    %v32 = vld [vmem:[%s1 + $0x2c] sm:$0xf]
    %v33 = vld [vmem:[%s1 + $0x30] sm:$0xf]
    %v34 = vld [vmem:[%s1 + $0x34] sm:$0xf]
    %v35 = vld [vmem:[%s1 + $0x38] sm:$0xf]
    %v36 = vld [vmem:[%s1 + $0x3c] sm:$0xf]
    %v37 = vld [vmem:[%s1 + $0x40] sm:$0xf]
    %v38 = vld [vmem:[%s1 + $0x44] sm:$0xf]
    %v39 = vld [vmem:[%s1 + $0x48] sm:$0xf]
    %v40 = vld [vmem:[%s1 + $0x4c] sm:$0xf]
    %v41 = vld [vmem:[%s1 + $0x50] sm:$0xf]
    %v42 = vld [vmem:[%s1 + $0x54] sm:$0xf]
    %v43 = vld [vmem:[%s1 + $0x58] sm:$0xf]
    %v44 = vld [vmem:[%s1 + $0x5c] sm:$0xf]
    %v45 = vld [vmem:[%s1 + $0x60] sm:$0x3]
    %v46 = vlaneseq
    %v47 = vshrl.u32 %v46, 7
    %v48 = vsub.s32 0, %v47
    %v49 = vrot.slane %v16, %v48
    %v54 = vunpack.c.l.b16 %v17
    %v55 = vunpack.c.h.b16 %v17
    %v56 = vunpack.c.l.b16 %v18
    %v57 = vunpack.c.h.b16 %v18
    %v58 = vunpack.c.l.b16 %v19
    %v59 = vunpack.c.h.b16 %v19
    %v60 = vunpack.c.l.b16 %v20
    %v61 = vunpack.c.h.b16 %v20
    %v62 = vpack.c.b16 %v56, %v54
    %v63 = vpack.c.b16 %v57, %v55
    %v64 = vpack.c.b16 %v60, %v58
    %v65 = vpack.c.b16 %v61, %v59
    %v93 = vunpack.c.l.b16 %v21
    %v94 = vunpack.c.l.b16 %v22
    %v95 = vunpack.c.l.b16 %v23
    %v96 = vunpack.c.l.b16 %v24
    %v97 = vunpack.c.l.b16 %v25
    %v98 = vunpack.c.l.b16 %v26
    %v99 = vunpack.c.l.b16 %v27
    %v100 = vunpack.c.l.b16 %v28
    %v101 = vunpack.c.l.b16 %v29
    %v102 = vunpack.c.l.b16 %v30
    %v103 = vunpack.c.l.b16 %v31
    %v104 = vunpack.c.l.b16 %v32
    %v105 = vunpack.c.l.b16 %v33
    %v106 = vunpack.c.l.b16 %v34
    %v107 = vunpack.c.l.b16 %v35
    %v108 = vunpack.c.l.b16 %v36
    %v109 = vunpack.c.l.b16 %v37
    %v110 = vunpack.c.l.b16 %v38
    %v111 = vunpack.c.l.b16 %v39
    %v112 = vunpack.c.l.b16 %v40
    %v113 = vunpack.c.l.b16 %v41
    %v114 = vunpack.c.l.b16 %v42
    %v115 = vunpack.c.l.b16 %v43
    %v116 = vunpack.c.l.b16 %v44
    %v117 = vunpack.c.l.b16 %v45
    %v118 = vpack.c.b16 %v94, %v93
    %v119 = vpack.c.b16 %v96, %v95
    %v120 = vpack.c.b16 %v98, %v97
    %v121 = vpack.c.b16 %v100, %v99
    %v122 = vpack.c.b16 %v102, %v101
    %v123 = vpack.c.b16 %v104, %v103
    %v124 = vpack.c.b16 %v106, %v105
    %v125 = vpack.c.b16 %v108, %v107
    %v126 = vpack.c.b16 %v110, %v109
    %v127 = vpack.c.b16 %v112, %v111
    %v128 = vpack.c.b16 %v114, %v113
    %v129 = vpack.c.b16 %v116, %v115
    %v130 = vpack.c.b16 %v117, %v117
    %vm143 = vcmask 556032
    %v145 = vsel %vm143, %v63, 0
    %v148 = vsel %vm143, %v65, 0
    %vm150 = vcmask 1041408
    %v152 = vsel %vm150, %v130, 0
    %154 = vmatprep.subr.bf16.mxu0 0
    %155 = vmatpush1.bf16.msra.mxu0 %v118
    %156 = vmatprep.subr.bf16.mxu0 0
    %157 = vmatpush1.bf16.msra.mxu0 %v119
    %158 = vmatprep.subr.bf16.mxu0 0
    %159 = vmatpush1.bf16.msra.mxu0 %v120
    %160 = vmatprep.subr.bf16.mxu0 0
    %161 = vmatpush1.bf16.msra.mxu0 %v121
    %162 = vmatprep.subr.bf16.mxu0 0
    %163 = vmatpush1.bf16.msra.mxu0 %v122
    %164 = vmatprep.subr.bf16.mxu0 0
    %165 = vmatpush1.bf16.msra.mxu0 %v123
    %166 = vmatprep.subr.bf16.mxu0 0
    %167 = vmatpush1.bf16.msra.mxu0 %v124
    %168 = vmatprep.subr.bf16.mxu0 0
    %169 = vmatpush1.bf16.msra.mxu0 %v125
    %170 = vmatprep.subr.bf16.mxu0 0
    %171 = vmatpush1.bf16.msra.mxu0 %v126
    %172 = vmatprep.subr.bf16.mxu0 0
    %173 = vmatpush1.bf16.msra.mxu0 %v127
    %174 = vmatprep.subr.bf16.mxu0 0
    %175 = vmatpush1.bf16.msra.mxu0 %v128
    %176 = vmatprep.subr.bf16.mxu0 0
    %177 = vmatpush1.bf16.msra.mxu0 %v129
    %178 = vmatprep.subr.bf16.mxu0 0
    %179 = vmatpush1.bf16.msra.mxu0 %v152
    %180 = vmatprep.subr.bf16.mxu0 0
    %181 = vmatpush1.bf16.msra.mxu0 0
    %182 = vmatprep.subr.bf16.mxu0 0
    %183 = vmatpush1.bf16.msra.mxu0 0
    %184 = vmatprep.subr.bf16.mxu0 0
    %185 = vmatpush1.bf16.msra.mxu0 0
    %186 = vmatprep.mubr.bf16.mxu0 %v145
    %187 = vmatmul.mubr.bf16.gmra.mrb[0].mxu0 %v62
    %v188 = vpop.f32.mrb[0].mxu0
    %v189 = vadd.f32 %v49, %v188
    %v190 = vpop.f32.mrb[0].mxu0
    %v191 = vpop.f32.mrb[0].mxu0
    %v192 = vadd.f32 %v49, %v191
    %v193 = vpop.f32.mrb[0].mxu0
    %194 = vmatprep.mubr.bf16.mxu0 %v148
    %195 = vmatmul.mubr.bf16.gmra.mrb[0].mxu0 %v64
    %v196 = vpop.f32.mrb[0].mxu0
    %v197 = vadd.f32 %v49, %v196
    %v198 = vpop.f32.mrb[0].mxu0
    %v199 = vpop.f32.mrb[0].mxu0
    %v200 = vadd.f32 %v49, %v199
    %v201 = vpop.f32.mrb[0].mxu0
    %202 = vdwg.mxu0
    %vm203 = vcmask 261120
    %v204 = vsel %vm203, %v189, 0.0
    %205 = vadd.xlane.f32.xlu0 %v204
    %v206 = vpop.xlane.xlu0 %205
    %v207 = vsel %vm203, %v192, 0.0
    %208 = vadd.xlane.f32.xlu0 %v207
    %v209 = vpop.xlane.xlu0 %208
    %v210 = vsel %vm203, %v197, 0.0
    %211 = vadd.xlane.f32.xlu0 %v210
    %v212 = vpop.xlane.xlu0 %211
    %v213 = vsel %vm203, %v200, 0.0
    %214 = vadd.xlane.f32.xlu0 %v213
    %v215 = vpop.xlane.xlu0 %214
    %v216 = vmul.f32 %v206, 0.03125
    %v217 = vmul.f32 %v209, 0.03125
    %v218 = vmul.f32 %v212, 0.03125
    %v219 = vmul.f32 %v215, 0.03125
    %v220 = vsub.f32 %v189, %v216
    %v221 = vsub.f32 %v192, %v217
    %v222 = vsub.f32 %v197, %v218
    %v223 = vsub.f32 %v200, %v219
    %v224 = vmul.f32 %v220, %v220
    %v225 = vmul.f32 %v221, %v221
    %v226 = vmul.f32 %v222, %v222
    %v227 = vmul.f32 %v223, %v223
    %v228 = vsel %vm203, %v224, 0.0
    %229 = vadd.xlane.f32.xlu0 %v228
    %v230 = vpop.xlane.xlu0 %229
    %v231 = vsel %vm203, %v225, 0.0
    %232 = vadd.xlane.f32.xlu0 %v231
    %v233 = vpop.xlane.xlu0 %232
    %v234 = vsel %vm203, %v226, 0.0
    %235 = vadd.xlane.f32.xlu0 %v234
    %v236 = vpop.xlane.xlu0 %235
    %v237 = vsel %vm203, %v227, 0.0
    %238 = vadd.xlane.f32.xlu0 %v237
    %v239 = vpop.xlane.xlu0 %238
    %v240 = vmul.f32 %v230, 0.03125
    %v241 = vmul.f32 %v233, 0.03125
    %v242 = vmul.f32 %v236, 0.03125
    %v243 = vmul.f32 %v239, 0.03125
    %v244 = vadd.f32 %v240, 1e-05
    %v245 = vadd.f32 %v241, 1e-05
    %v246 = vadd.f32 %v242, 1e-05
    %v247 = vadd.f32 %v243, 1e-05
    %v248 = vrsqrt.pop %v244
    %v249 = vrsqrt.pop %v245
    %v250 = vrsqrt.pop %v246
    %v251 = vrsqrt.pop %v247
    %v252 = vmul.f32 %v220, %v248
    %v253 = vmul.f32 %v221, %v249
    %v254 = vmul.f32 %v222, %v250
    %v255 = vmul.f32 %v223, %v251
    %v256 = vlaneseq
    %v257 = vshrl.u32 %v256, 7
    %v258 = vsub.s32 1, %v257
    %v259 = vrot.slane %v16, %v258
    %v260 = vmul.f32 %v252, %v259
    %v261 = vmul.f32 %v253, %v259
    %v262 = vmul.f32 %v254, %v259
    %v263 = vmul.f32 %v255, %v259
    %v264 = vlaneseq
    %v265 = vshrl.u32 %v264, 7
    %v266 = vsub.s32 2, %v265
    %v267 = vrot.slane %v16, %v266
    %v268 = vadd.f32 %v260, %v267
    %v269 = vadd.f32 %v261, %v267
    %v270 = vadd.f32 %v262, %v267
    %v271 = vadd.f32 %v263, %v267
    %272 = vst.msk [vmem:[#allocation2] sm:$0xff] %vm203, %v268
    %273 = vst.msk [vmem:[#allocation2 + $0x8] sm:$0xff] %vm203, %v269
    %274 = vst.msk [vmem:[#allocation2 + $0x10] sm:$0xff] %vm203, %v270
    %275 = vst.msk [vmem:[#allocation2 + $0x18] sm:$0xff] %vm203, %v271
    // Predicated region
    $region14: #{tpu_custom_call.1} parent=1 // pred_check
      _
    $region15: #{tpu_custom_call.1} parent=1 // pred_check_branch
      %277 = sbr.rel (0) target = $region17
    $region16: #{tpu_custom_call.1} parent=1 // pred_region
      %s279 = ssub.s32 512, 512
      %280 = vsyncadd [#allocation3], %s279
      %s281 = sshll.u32 [#allocation2], 4
      %s282 = int_to_ptr.vmem [resolvable:$true] %s281
      %287 = dma.vmem_to_hbm [thread:$0]  %s282, 512, %s3, [#allocation3], 128, 128, 8
    $region17: #{tpu_custom_call.1} parent=1 // pred_fallthru
      _
    // Predicated region
    $region18: #{tpu_custom_call.1} parent=1 // pred_check
      _
    $region19: #{tpu_custom_call.1} parent=1 // pred_check_branch
      %289 = sbr.rel (0) target = $region21
    $region20: #{tpu_custom_call.1} parent=1 // pred_region
      %290 = dma.done [#allocation3], 512
    $region21: #{tpu_custom_call.1} parent=1 // pred_fallthru
      _
    %291 = vsyncpa [#allocation3], 1

</llo_original>
